<compile_context>
chip_gen: v7x
topology: tpu7x:2x2x1
jax: 0.10.0
libtpu: 0.0.40
codegen_flags: <defaults>
</compile_context>

<pallas_src>
import functools

import jax
import jax.numpy as jnp
from jax.experimental import pallas as pl
from jax.experimental.pallas import tpu as pltpu

_MiB = 1024 * 1024


def _round_up(x, m):
    return ((x + m - 1) // m) * m


def _vmem_capacity_bytes():
    """Physical VMEM of the attached TPU; conservative (v7x: 64 MiB) if unknown."""
    try:
        info = pltpu.get_tpu_info()
        for attr in ("vmem_capacity_bytes", "vmem_size_bytes", "vmem_bytes"):
            v = getattr(info, attr, None)
            if v:
                return int(v)
    except Exception:
        pass
    return 64 * _MiB


def _make_stream_spec(block_shape, index_map, *, buffers=2):
    """BlockSpec with optional deeper pipelining (Buffered(3) on 128 MiB parts)."""
    if buffers > 2:
        try:
            return pl.BlockSpec(block_shape, index_map,
                                pipeline_mode=pl.Buffered(buffers))
        except TypeError:  # older BlockSpec signature without pipeline_mode
            pass
    return pl.BlockSpec(block_shape, index_map)


# --------------------------------------------------------------------------------------
# Fused single-launch kernel: pool + MLP + gate for one sample's (C, HW) slab.
# --------------------------------------------------------------------------------------
def _fused_kernel(x_ref, w1t_ref, b1_ref, w2_ref, b2_ref, o_ref, *, inv_hw):
    x = x_ref[...]                                                        # (C, HW)
    # Pooling: channels on sublanes, HW on lanes.
    mean = jnp.sum(x.astype(jnp.float32), axis=-1, keepdims=True) * inv_hw  # (C, 1)
    mx = jnp.max(x, axis=-1, keepdims=True).astype(jnp.float32)             # (C, 1)

    w1t = w1t_ref[...]   # (C, Cr) f32
    b1 = b1_ref[...]     # (1, Cr)
    w2 = w2_ref[...]     # (C, Cr)
    b2 = b2_ref[...]     # (C, 1)

    # fc1 (contract over C = sublane axis) + ReLU, done on the VPU — no MXU needed
    # for these tiny matrices.
    h_avg = jnp.maximum(jnp.sum(w1t * mean, axis=0, keepdims=True) + b1, 0.0)  # (1, Cr)
    h_max = jnp.maximum(jnp.sum(w1t * mx, axis=0, keepdims=True) + b1, 0.0)    # (1, Cr)
    # fc2 (contract over Cr = lane axis).
    o_avg = jnp.sum(w2 * h_avg, axis=-1, keepdims=True) + b2                   # (C, 1)
    o_max = jnp.sum(w2 * h_max, axis=-1, keepdims=True) + b2                   # (C, 1)

    gate = jax.nn.sigmoid(o_avg + o_max)                                       # (C, 1) f32
    o_ref[...] = gate.astype(x.dtype) * x


# --------------------------------------------------------------------------------------
# Streaming pass 1: per-channel [sum, max] over HW, split axis x reduction axis.
# --------------------------------------------------------------------------------------
def _pool_kernel(x_ref, stats_ref, *, hw_total, hw_tile, tiles_per_split, needs_mask):
    s = pl.program_id(0)        # HW half (parallel — feeds both v7x TensorCores)
    t = pl.program_id(2)        # tile within the half (arbitrary / reduction)
    xf = x_ref[...].astype(jnp.float32)                                   # (C, hw_tile)

    if needs_mask:
        # Valid lanes of this tile: lane < HW - global_tile_offset.  rem <= 0 for
        # fully out-of-range tiles at the tail of a split; rem >= hw_tile for full tiles.
        rem = hw_total - (s * tiles_per_split + t) * hw_tile
        valid = jax.lax.broadcasted_iota(jnp.int32, xf.shape, 1) < rem
        xs = jnp.where(valid, xf, 0.0)        # sum must be masked too (OOB lanes are
        xm = jnp.where(valid, xf, -jnp.inf)   # unspecified, not zeros)
    else:
        xs = xf
        xm = xf

    part_sum = jnp.sum(xs, axis=-1, keepdims=True)                        # (C, 1)
    part_max = jnp.max(xm, axis=-1, keepdims=True)                        # (C, 1)

    @pl.when(t == 0)
    def _init():
        stats_ref[:, 0:1] = part_sum
        stats_ref[:, 1:2] = part_max

    @pl.when(t != 0)
    def _accumulate():
        stats_ref[:, 0:1] = stats_ref[:, 0:1] + part_sum
        stats_ref[:, 1:2] = jnp.maximum(stats_ref[:, 1:2], part_max)


# --------------------------------------------------------------------------------------
# Streaming pass 2: o = gate * x (gate broadcast over the HW lanes).
# --------------------------------------------------------------------------------------
def _gate_kernel(gate_ref, x_ref, o_ref):
    o_ref[...] = gate_ref[...].astype(x_ref.dtype) * x_ref[...]


# --------------------------------------------------------------------------------------
# Wrapper
# --------------------------------------------------------------------------------------
@functools.partial(jax.jit, static_argnames=("target_tile_bytes", "force_two_pass"))
def channel_attention(x, w1, b1, w2, b2, *,
                      target_tile_bytes=8 * _MiB, force_two_pass=False):
    """x: (N, C, H, W); w1: (Cr, C); b1: (Cr,); w2: (C, Cr); b2: (C,)."""
    N, C, H, W = x.shape
    HW = H * W
    Cr = w1.shape[0]
    itemsize = jnp.dtype(x.dtype).itemsize
    x_flat = x.reshape(N, C, HW)

    f32 = jnp.float32
    w1t = jnp.asarray(w1, f32).T                    # (C, Cr) — C on sublanes
    b1r = jnp.asarray(b1, f32).reshape(1, Cr)
    w2f = jnp.asarray(w2, f32)                      # (C, Cr)
    b2r = jnp.asarray(b2, f32).reshape(C, 1)

    vmem_cap = _vmem_capacity_bytes()
    big_vmem = vmem_cap >= 100 * _MiB               # 128 MiB parts (v5e/v6e)
    vmem_limit = 96 * _MiB if big_vmem else 48 * _MiB
    stream_buffers = 3 if big_vmem else 2

    # ---- Fused single-launch path: pool + MLP + gate per sample --------------------
    slab_in = C * HW * itemsize
    cast_scratch = 0 if x.dtype == f32 else 2 * C * HW * 4
    w_bytes = 4 * (w1t.size + b1r.size + w2f.size + b2r.size)
    fused_need = 4 * slab_in + cast_scratch + w_bytes + 1 * _MiB
    if (not force_two_pass) and fused_need <= vmem_limit - 4 * _MiB:
        out_flat = pl.pallas_call(
            functools.partial(_fused_kernel, inv_hw=1.0 / HW),
            out_shape=jax.ShapeDtypeStruct((N, C, HW), x.dtype),
            grid=(N,),
            in_specs=[
                pl.BlockSpec((pl.Squeezed(), C, HW), lambda n: (n, 0, 0)),
                pl.BlockSpec((C, Cr), lambda n: (0, 0)),
                pl.BlockSpec((1, Cr), lambda n: (0, 0)),
                pl.BlockSpec((C, Cr), lambda n: (0, 0)),
                pl.BlockSpec((C, 1), lambda n: (0, 0)),
            ],
            out_specs=pl.BlockSpec((pl.Squeezed(), C, HW), lambda n: (n, 0, 0)),
            compiler_params=pltpu.CompilerParams(
                dimension_semantics=("parallel",),
                vmem_limit_bytes=int(vmem_limit)),
        )(x_flat, w1t, b1r, w2f, b2r)
        return out_flat.reshape(N, C, H, W)

    # ---- Streaming two-pass fallback (per-sample slab does not fit in VMEM) --------
    # Lane-dense tile: multiple of 128 lanes, sized to ~target_tile_bytes but capped so
    # the pipelined working set stays inside the VMEM budget.  (Assumes C * 128 lanes
    # fits a buffer, true for any realistic CNN channel count.)
    hw_tile = (target_tile_bytes // max(1, C * itemsize)) // 128 * 128
    hw_cap = ((vmem_limit - 2 * _MiB) // (6 * max(1, C * itemsize))) // 128 * 128
    hw_tile = max(128, min(hw_tile, hw_cap, _round_up(HW, 128)))
    n_tiles = pl.cdiv(HW, hw_tile)

    # Split the HW axis into 2 parallel halves so pass 1 uses both TensorCores on v7x
    # even for N == 1; near-zero cost on single-core chips.
    n_splits = 2 if n_tiles >= 8 else 1
    tiles_per_split = pl.cdiv(n_tiles, n_splits)
    needs_mask = (n_splits * tiles_per_split * hw_tile) != HW

    def _make_pool_x_map(tps, last_block):
        def index_map(s, n, t):
            # Clamp fully out-of-range tiles (their contribution is masked in-kernel).
            return (n, 0, jnp.minimum(s * tps + t, last_block))
        return index_map

    # Pass 1: streaming avg/max pooling -> partial stats (n_splits, N, C, 2) = [sum, max]
    stats = pl.pallas_call(
        functools.partial(_pool_kernel, hw_total=HW, hw_tile=hw_tile,
                          tiles_per_split=tiles_per_split, needs_mask=needs_mask),
        out_shape=jax.ShapeDtypeStruct((n_splits, N, C, 2), jnp.float32),
        grid=(n_splits, N, tiles_per_split),
        in_specs=[_make_stream_spec((pl.Squeezed(), C, hw_tile),
                                    _make_pool_x_map(tiles_per_split, n_tiles - 1),
                                    buffers=stream_buffers)],
        out_specs=pl.BlockSpec((pl.Squeezed(), pl.Squeezed(), C, 2),
                               lambda s, n, t: (s, n, 0, 0)),
        compiler_params=pltpu.CompilerParams(
            dimension_semantics=("parallel", "parallel", "arbitrary"),
            vmem_limit_bytes=int(vmem_limit)),
    )(x_flat)

    # Combine the HW halves + tiny MLP + sigmoid in plain JAX (weights never stream).
    total_sum = jnp.sum(stats[..., 0], axis=0)                     # (N, C)
    total_max = jnp.max(stats[..., 1], axis=0)                     # (N, C)
    pooled = jnp.stack([total_sum * (1.0 / HW), total_max], axis=1)  # (N, 2, C)
    h = jnp.maximum(jnp.einsum("ntc,cr->ntr", pooled, w1t) + b1r[None], 0.0)
    o = jnp.einsum("ntr,cr->ntc", h, w2f) + jnp.asarray(b2, f32)[None, None, :]
    gate = jax.nn.sigmoid(o[:, 0, :] + o[:, 1, :]).reshape(N, C, 1)  # f32

    # Pass 2: streaming gate * x, fully parallel grid, ragged last tile handled by
    # Pallas' clamped writeback (no padding / post-slice needed).
    out_flat = pl.pallas_call(
        _gate_kernel,
        out_shape=jax.ShapeDtypeStruct((N, C, HW), x.dtype),
        grid=(N, n_tiles),
        in_specs=[
            pl.BlockSpec((pl.Squeezed(), C, 1), lambda n, t: (n, 0, 0)),
            _make_stream_spec((pl.Squeezed(), C, hw_tile), lambda n, t: (n, 0, t),
                              buffers=stream_buffers),
        ],
        out_specs=pl.BlockSpec((pl.Squeezed(), C, hw_tile), lambda n, t: (n, 0, t)),
        compiler_params=pltpu.CompilerParams(
            dimension_semantics=("parallel", "parallel"),
            vmem_limit_bytes=int(vmem_limit)),
    )(gate, x_flat)

    return out_flat.reshape(N, C, H, W)


def reference(x, w1, b1, w2, b2):
    """Pure-JAX reference of the PyTorch ChannelAttention.forward."""
    avg = jnp.mean(x, axis=(2, 3))
    mx = jnp.max(x, axis=(2, 3))

    def mlp(v):  # v: (N, C)
        h = jnp.maximum(v @ w1.T + b1, 0.0)
        return h @ w2.T + b2

    gate = jax.nn.sigmoid(mlp(avg) + mlp(mx))[:, :, None, None]
    return gate * x


if __name__ == "__main__":
    def make_params(key, C, Cr):
        k1, k2, k3, k4 = jax.random.split(key, 4)
        w1 = jax.random.normal(k1, (Cr, C), jnp.float32) * (1.0 / jnp.sqrt(C))
        b1 = jax.random.normal(k2, (Cr,), jnp.float32) * 0.1
        w2 = jax.random.normal(k3, (C, Cr), jnp.float32) * (1.0 / jnp.sqrt(Cr))
        b2 = jax.random.normal(k4, (C,), jnp.float32) * 0.1
        return w1, b1, w2, b2

    key = jax.random.PRNGKey(0)
    # in_channels=16, reduction_ratio=0.125 -> reduced_channels=2
    N, C = 2, 16
    Cr = int(C * 0.125)
    kp, k1, k2, k3, k4 = jax.random.split(key, 5)
    w1, b1, w2, b2 = make_params(kp, C, Cr)

    # 1) Small shape -> fused single-launch path.
    x = jax.random.normal(k1, (N, C, 16, 16), jnp.float32)
    out = jax.block_until_ready(channel_attention(x, w1, b1, w2, b2))
    assert out.shape == x.shape
    assert jnp.allclose(out, reference(x, w1, b1, w2, b2), atol=1e-5, rtol=1e-5), \
        "mismatch vs reference (fused)"

    # 2) HW not a multiple of 128 -> fused path with an odd spatial extent.
    x2 = jax.random.normal(k2, (N, C, 12, 12), jnp.float32)
    out2 = jax.block_until_ready(channel_attention(x2, w1, b1, w2, b2))
    assert jnp.allclose(out2, reference(x2, w1, b1, w2, b2), atol=1e-5, rtol=1e-5), \
        "mismatch vs reference (fused, ragged HW)"

    # 3) Force the streaming two-pass path with a tiny tile: ragged last tile + a
    #    fully-out-of-range tile on the second HW split (masked in-kernel).
    x3 = jax.random.normal(k3, (N, C, 33, 33), jnp.float32)
    out3 = jax.block_until_ready(channel_attention(
        x3, w1, b1, w2, b2, force_two_pass=True, target_tile_bytes=C * 128 * 4))
    assert jnp.allclose(out3, reference(x3, w1, b1, w2, b2), atol=1e-5, rtol=1e-5), \
        "mismatch vs reference (two-pass, ragged)"

    # 4) Exactly divisible multi-tile streaming path (no masking, even HW split).
    x4 = jax.random.normal(k4, (N, C, 32, 32), jnp.float32)
    out4 = jax.block_until_ready(channel_attention(
        x4, w1, b1, w2, b2, force_two_pass=True, target_tile_bytes=C * 128 * 4))
    assert jnp.allclose(out4, reference(x4, w1, b1, w2, b2), atol=1e-5, rtol=1e-5), \
        "mismatch vs reference (two-pass, exact tiles)"

    print("KERNEL_OK")
</pallas_src>

<mosaic_0001>
module attributes {stable_mosaic.version = 11 : i64} {
  func.func @_fused_kernel(%arg0: i32, %arg1: memref<1x16x256xf32, #tpu.memory_space<vmem>>, %arg2: memref<16x2xf32, #tpu.memory_space<vmem>>, %arg3: memref<1x2xf32, #tpu.memory_space<vmem>>, %arg4: memref<16x2xf32, #tpu.memory_space<vmem>>, %arg5: memref<16x1xf32, #tpu.memory_space<vmem>>, %arg6: memref<1x16x256xf32, #tpu.memory_space<vmem>>) attributes {dimension_semantics = [#tpu.dimension_semantics<parallel>], iteration_bounds = array<i64: 2>, scalar_prefetch = 0 : i64, scratch_operands = 0 : i64, tpu.core_type = #tpu.core_type<tc>, window_params = [{transform_indices = @transform_0, window_bounds = array<i64: 1, 16, 256>}, {pipeline_mode = #tpu.pipeline_mode<synchronous>, transform_indices = @transform_1, window_bounds = array<i64: 16, 2>}, {pipeline_mode = #tpu.pipeline_mode<synchronous>, transform_indices = @transform_2, window_bounds = array<i64: 1, 2>}, {pipeline_mode = #tpu.pipeline_mode<synchronous>, transform_indices = @transform_3, window_bounds = array<i64: 16, 2>}, {pipeline_mode = #tpu.pipeline_mode<synchronous>, transform_indices = @transform_4, window_bounds = array<i64: 16, 1>}, {transform_indices = @transform_5, window_bounds = array<i64: 1, 16, 256>}]} {
    %c0 = arith.constant 0 : index
    %c0_0 = arith.constant 0 : index
    %c0_1 = arith.constant 0 : index
    %0 = vector.load %arg1[%c0, %c0_0, %c0_1] : memref<1x16x256xf32, #tpu.memory_space<vmem>>, vector<1x16x256xf32>
    %1 = vector.shape_cast %0 : vector<1x16x256xf32> to vector<16x256xf32>
    %cst = arith.constant dense<0.000000e+00> : vector<16xf32>
    %2 = vector.multi_reduction <add>, %1, %cst [1] : vector<16x256xf32> to vector<16xf32>
    %3 = vector.shape_cast %2 : vector<16xf32> to vector<16x1xf32>
    %cst_2 = arith.constant 3.906250e-03 : f32
    %4 = vector.broadcast %cst_2 : f32 to vector<16x1xf32>
    %5 = arith.mulf %3, %4 : vector<16x1xf32>
    %cst_3 = arith.constant dense<0xFF800000> : vector<16xf32>
    %6 = vector.multi_reduction <maximumf>, %1, %cst_3 [1] : vector<16x256xf32> to vector<16xf32>
    %7 = vector.shape_cast %6 : vector<16xf32> to vector<16x1xf32>
    %c0_4 = arith.constant 0 : index
    %c0_5 = arith.constant 0 : index
    %8 = vector.load %arg2[%c0_4, %c0_5] : memref<16x2xf32, #tpu.memory_space<vmem>>, vector<16x2xf32>
    %c0_6 = arith.constant 0 : index
    %c0_7 = arith.constant 0 : index
    %9 = vector.load %arg3[%c0_6, %c0_7] : memref<1x2xf32, #tpu.memory_space<vmem>>, vector<1x2xf32>
    %c0_8 = arith.constant 0 : index
    %c0_9 = arith.constant 0 : index
    %10 = vector.load %arg4[%c0_8, %c0_9] : memref<16x2xf32, #tpu.memory_space<vmem>>, vector<16x2xf32>
    %c0_10 = arith.constant 0 : index
    %c0_11 = arith.constant 0 : index
    %11 = vector.load %arg5[%c0_10, %c0_11] : memref<16x1xf32, #tpu.memory_space<vmem>>, vector<16x1xf32>
    %12 = vector.broadcast %5 : vector<16x1xf32> to vector<16x2xf32>
    %13 = arith.mulf %8, %12 : vector<16x2xf32>
    %cst_12 = arith.constant dense<0.000000e+00> : vector<2xf32>
    %14 = vector.multi_reduction <add>, %13, %cst_12 [0] : vector<16x2xf32> to vector<2xf32>
    %15 = vector.shape_cast %14 : vector<2xf32> to vector<1x2xf32>
    %16 = arith.addf %15, %9 : vector<1x2xf32>
    %cst_13 = arith.constant 0.000000e+00 : f32
    %17 = vector.broadcast %cst_13 : f32 to vector<1x2xf32>
    %18 = arith.maximumf %16, %17 : vector<1x2xf32>
    %19 = vector.broadcast %7 : vector<16x1xf32> to vector<16x2xf32>
    %20 = arith.mulf %8, %19 : vector<16x2xf32>
    %cst_14 = arith.constant dense<0.000000e+00> : vector<2xf32>
    %21 = vector.multi_reduction <add>, %20, %cst_14 [0] : vector<16x2xf32> to vector<2xf32>
    %22 = vector.shape_cast %21 : vector<2xf32> to vector<1x2xf32>
    %23 = arith.addf %22, %9 : vector<1x2xf32>
    %cst_15 = arith.constant 0.000000e+00 : f32
    %24 = vector.broadcast %cst_15 : f32 to vector<1x2xf32>
    %25 = arith.maximumf %23, %24 : vector<1x2xf32>
    %26 = vector.broadcast %18 : vector<1x2xf32> to vector<16x2xf32>
    %27 = arith.mulf %10, %26 : vector<16x2xf32>
    %cst_16 = arith.constant dense<0.000000e+00> : vector<16xf32>
    %28 = vector.multi_reduction <add>, %27, %cst_16 [1] : vector<16x2xf32> to vector<16xf32>
    %29 = vector.shape_cast %28 : vector<16xf32> to vector<16x1xf32>
    %30 = arith.addf %29, %11 : vector<16x1xf32>
    %31 = vector.broadcast %25 : vector<1x2xf32> to vector<16x2xf32>
    %32 = arith.mulf %10, %31 : vector<16x2xf32>
    %cst_17 = arith.constant dense<0.000000e+00> : vector<16xf32>
    %33 = vector.multi_reduction <add>, %32, %cst_17 [1] : vector<16x2xf32> to vector<16xf32>
    %34 = vector.shape_cast %33 : vector<16xf32> to vector<16x1xf32>
    %35 = arith.addf %34, %11 : vector<16x1xf32>
    %36 = arith.addf %30, %35 : vector<16x1xf32>
    %37 = arith.negf %36 : vector<16x1xf32>
    %38 = math.exp %37 : vector<16x1xf32>
    %cst_18 = arith.constant 1.000000e+00 : f32
    %39 = vector.broadcast %cst_18 : f32 to vector<16x1xf32>
    %40 = arith.addf %39, %38 : vector<16x1xf32>
    %41 = arith.divf %39, %40 : vector<16x1xf32>
    %42 = vector.broadcast %41 : vector<16x1xf32> to vector<16x256xf32>
    %43 = arith.mulf %42, %1 : vector<16x256xf32>
    %c0_19 = arith.constant 0 : index
    %c0_20 = arith.constant 0 : index
    %c0_21 = arith.constant 0 : index
    %44 = vector.load %arg6[%c0_19, %c0_20, %c0_21] : memref<1x16x256xf32, #tpu.memory_space<vmem>>, vector<1x16x256xf32>
    %45 = vector.shape_cast %44 : vector<1x16x256xf32> to vector<16x256xf32>
    %46 = vector.shape_cast %43 : vector<16x256xf32> to vector<1x16x256xf32>
    tpu.vector_store %arg6[%c0_19, %c0_20, %c0_21], %46 {strides = array<i32>} : memref<1x16x256xf32, #tpu.memory_space<vmem>>, vector<1x16x256xf32>,
    return
  }
  func.func @transform_0(%arg0: i32) -> (i32, i32, i32) {
    %c0_i32 = arith.constant 0 : i32
    %c0_i32_0 = arith.constant 0 : i32
    %c0_i32_1 = arith.constant 0 : i32
    return %arg0, %c0_i32, %c0_i32_0 : i32, i32, i32
  }
  func.func @transform_1(%arg0: i32) -> (i32, i32) {
    %c0_i32 = arith.constant 0 : i32
    %c0_i32_0 = arith.constant 0 : i32
    %c0_i32_1 = arith.constant 0 : i32
    return %c0_i32, %c0_i32_0 : i32, i32
  }
  func.func @transform_2(%arg0: i32) -> (i32, i32) {
    %c0_i32 = arith.constant 0 : i32
    %c0_i32_0 = arith.constant 0 : i32
    %c0_i32_1 = arith.constant 0 : i32
    return %c0_i32, %c0_i32_0 : i32, i32
  }
  func.func @transform_3(%arg0: i32) -> (i32, i32) {
    %c0_i32 = arith.constant 0 : i32
    %c0_i32_0 = arith.constant 0 : i32
    %c0_i32_1 = arith.constant 0 : i32
    return %c0_i32, %c0_i32_0 : i32, i32
  }
  func.func @transform_4(%arg0: i32) -> (i32, i32) {
    %c0_i32 = arith.constant 0 : i32
    %c0_i32_0 = arith.constant 0 : i32
    %c0_i32_1 = arith.constant 0 : i32
    return %c0_i32, %c0_i32_0 : i32, i32
  }
  func.func @transform_5(%arg0: i32) -> (i32, i32, i32) {
    %c0_i32 = arith.constant 0 : i32
    %c0_i32_0 = arith.constant 0 : i32
    %c0_i32_1 = arith.constant 0 : i32
    return %arg0, %c0_i32, %c0_i32_0 : i32, i32, i32
  }
}

</mosaic_0001>

<llo_original>
// kernel: channel_attention.1
$region0: #{channel_attention.1}
  #allocation0 [shape = 'u32[]', space=smem, size = 0x4, offset = 0x4, fixed_abs, tag = 'smem constant byte address 0x4 - core index']
  #allocation1 [shape = 'u32[144,128]{1,0:T(1,128)}', space=vmem, size = 0x12000, scoped, tag = 'internal scratch']
  %s0 = inlined_call_operand.vmem [shape: f32[2,16,256], index: 0, kind: input, shape index: {}]
  %s1 = inlined_call_operand.vmem [shape: f32[16,2], index: 1, kind: input, shape index: {}]
  %s2 = inlined_call_operand.vmem [shape: f32[1,2], index: 2, kind: input, shape index: {}]
  %s3 = inlined_call_operand.vmem [shape: f32[16,2], index: 3, kind: input, shape index: {}]
  %s4 = inlined_call_operand.vmem [shape: f32[16,1], index: 4, kind: input, shape index: {}]
  %s5 = inlined_call_operand.vmem [shape: f32[2,16,256], index: 5, kind: output, shape index: {}]
  %s6 = sld [smem:[#allocation0]]
  $region53: #{channel_attention.1} parent=0
    _
  %s8 = ssub.s32 1, %s6
  %s9 = scalar_select 0, %s8, %s6
  loop: start=0, step=1, limit=4
  $region2: #{channel_attention.1} parent=0 // loop_pre_header
    _
  $region3: #{channel_attention.1} parent=0 // loop_header
    %s11 = sphi 0, %s15
    %p12 = scmp.ge.s32.totalorder %s11, 4
    %s21 = sphi 0, %s23
    %s24 = sphi 0, %s21
    %s25 = sphi 0, %s24
    %s41 = sphi 0, %s25
    %s45 = sphi 0, %s45
    %s47 = sphi 0, %s45
    %s48 = sphi 0, %s47
    %s62 = sphi 0, %s48
    %s66 = sphi 0, %s66
    %s68 = sphi 0, %s66
    %s69 = sphi 0, %s68
    %s83 = sphi 0, %s69
    %s87 = sphi 0, %s87
    %s89 = sphi 0, %s87
    %s90 = sphi 0, %s89
    %s104 = sphi 0, %s90
    %s108 = sphi 0, %s108
    %s110 = sphi 0, %s108
    %s111 = sphi 0, %s110
    %s125 = sphi 0, %s111
    %s131 = sphi 0, %s133
    %s134 = sphi 0, %s131
    %s135 = sphi 0, %s134
    %s151 = sphi 0, %s135
  $region4: #{channel_attention.1} parent=0 // loop_header_branch
    %14 = sbr.rel (%p12) target = $region8
  $region5: #{channel_attention.1} parent=0 // loop_body
    %s16 = ssub.s32 %s11, 1
    %s17 = ssub.s32 %s11, 2
    %s18 = sadd.s32 %s11, 1
    %s19 = ssub.s32 %s11, %s18
    %p20 = scmp.eq.s32.totalorder %s19, 0
    %s22 = sadd.s32 %s21, 1
    %s23 = scalar_select %p20, %s21, %s22
    %p26 = pneg %p20
    %p27 = scmp.eq.s32.totalorder %s11, 1
    %p28 = por %p26, %p27
    %p29 = scmp.ne.s32.totalorder %s21, %s24
    %p30 = scmp.eq.s32.totalorder %s11, 0
    %p31 = por %p29, %p30
    %p32 = scmp.ne.s32.totalorder %s21, %s24
    %p33 = scmp.eq.s32.totalorder %s16, 1
    %p34 = por %p32, %p33
    %p35 = scmp.ne.s32.totalorder %s24, %s25
    %p36 = scmp.eq.s32.totalorder %s16, 0
    %p37 = por %p35, %p36
    %p38 = scmp.ne.s32.totalorder %s24, %s25
    %p39 = scmp.eq.s32.totalorder %s17, 1
    %p40 = por %p38, %p39
    %p42 = scmp.ne.s32.totalorder %s25, %s41
    %p43 = scmp.eq.s32.totalorder %s17, 0
    %p44 = por %p42, %p43
    %s46 = sadd.s32 %s45, 1
    %p49 = scmp.eq.s32.totalorder %s11, 1
    %p50 = scmp.ne.s32.totalorder %s45, %s47
    %p51 = scmp.eq.s32.totalorder %s11, 0
    %p52 = por %p50, %p51
    %p53 = scmp.ne.s32.totalorder %s45, %s47
    %p54 = scmp.eq.s32.totalorder %s16, 1
    %p55 = por %p53, %p54
    %p56 = scmp.ne.s32.totalorder %s47, %s48
    %p57 = scmp.eq.s32.totalorder %s16, 0
    %p58 = por %p56, %p57
    %p59 = scmp.ne.s32.totalorder %s47, %s48
    %p60 = scmp.eq.s32.totalorder %s17, 1
    %p61 = por %p59, %p60
    %p63 = scmp.ne.s32.totalorder %s48, %s62
    %p64 = scmp.eq.s32.totalorder %s17, 0
    %p65 = por %p63, %p64
    %s67 = sadd.s32 %s66, 1
    %p70 = scmp.eq.s32.totalorder %s11, 1
    %p71 = scmp.ne.s32.totalorder %s66, %s68
    %p72 = scmp.eq.s32.totalorder %s11, 0
    %p73 = por %p71, %p72
    %p74 = scmp.ne.s32.totalorder %s66, %s68
    %p75 = scmp.eq.s32.totalorder %s16, 1
    %p76 = por %p74, %p75
    %p77 = scmp.ne.s32.totalorder %s68, %s69
    %p78 = scmp.eq.s32.totalorder %s16, 0
    %p79 = por %p77, %p78
    %p80 = scmp.ne.s32.totalorder %s68, %s69
    %p81 = scmp.eq.s32.totalorder %s17, 1
    %p82 = por %p80, %p81
    %p84 = scmp.ne.s32.totalorder %s69, %s83
    %p85 = scmp.eq.s32.totalorder %s17, 0
    %p86 = por %p84, %p85
    %s88 = sadd.s32 %s87, 1
    %p91 = scmp.eq.s32.totalorder %s11, 1
    %p92 = scmp.ne.s32.totalorder %s87, %s89
    %p93 = scmp.eq.s32.totalorder %s11, 0
    %p94 = por %p92, %p93
    %p95 = scmp.ne.s32.totalorder %s87, %s89
    %p96 = scmp.eq.s32.totalorder %s16, 1
    %p97 = por %p95, %p96
    %p98 = scmp.ne.s32.totalorder %s89, %s90
    %p99 = scmp.eq.s32.totalorder %s16, 0
    %p100 = por %p98, %p99
    %p101 = scmp.ne.s32.totalorder %s89, %s90
    %p102 = scmp.eq.s32.totalorder %s17, 1
    %p103 = por %p101, %p102
    %p105 = scmp.ne.s32.totalorder %s90, %s104
    %p106 = scmp.eq.s32.totalorder %s17, 0
    %p107 = por %p105, %p106
    %s109 = sadd.s32 %s108, 1
    %p112 = scmp.eq.s32.totalorder %s11, 1
    %p113 = scmp.ne.s32.totalorder %s108, %s110
    %p114 = scmp.eq.s32.totalorder %s11, 0
    %p115 = por %p113, %p114
    %p116 = scmp.ne.s32.totalorder %s108, %s110
    %p117 = scmp.eq.s32.totalorder %s16, 1
    %p118 = por %p116, %p117
    %p119 = scmp.ne.s32.totalorder %s110, %s111
    %p120 = scmp.eq.s32.totalorder %s16, 0
    %p121 = por %p119, %p120
    %p122 = scmp.ne.s32.totalorder %s110, %s111
    %p123 = scmp.eq.s32.totalorder %s17, 1
    %p124 = por %p122, %p123
    %p126 = scmp.ne.s32.totalorder %s111, %s125
    %p127 = scmp.eq.s32.totalorder %s17, 0
    %p128 = por %p126, %p127
    %s129 = ssub.s32 %s11, %s18
    %p130 = scmp.eq.s32.totalorder %s129, 0
    %s132 = sadd.s32 %s131, 1
    %s133 = scalar_select %p130, %s131, %s132
    %p136 = pneg %p130
    %p137 = scmp.eq.s32.totalorder %s11, 1
    %p138 = por %p136, %p137
    %p139 = scmp.ne.s32.totalorder %s131, %s134
    %p140 = scmp.eq.s32.totalorder %s11, 0
    %p141 = por %p139, %p140
    %p142 = scmp.ne.s32.totalorder %s131, %s134
    %p143 = scmp.eq.s32.totalorder %s16, 1
    %p144 = por %p142, %p143
    %p145 = scmp.ne.s32.totalorder %s134, %s135
    %p146 = scmp.eq.s32.totalorder %s16, 0
    %p147 = por %p145, %p146
    %p148 = scmp.ne.s32.totalorder %s134, %s135
    %p149 = scmp.eq.s32.totalorder %s17, 1
    %p150 = por %p148, %p149
    %p152 = scmp.ne.s32.totalorder %s135, %s151
    %p153 = scmp.eq.s32.totalorder %s17, 0
    %p154 = por %p152, %p153
    %p155 = scmp.le.s32.totalorder 1, %s11
    %p156 = scmp.lt.s32.totalorder %s11, 3
    %p157 = pnand %p155, %p156
    %p158 = pneg %p157
    // Predicated region
    $region9: #{channel_attention.1} parent=5 // pred_check
      _
    $region10: #{channel_attention.1} parent=5 // pred_check_branch
      %160 = sbr.rel (%p157) target = $region12
    $region11: #{channel_attention.1} parent=5 // pred_region
      %s161 = ssub.s32 %s11, 1
      // Predicated region
      $region13: #{channel_attention.1} parent=11 // pred_check
        %p162 = pneg %p58
      $region14: #{channel_attention.1} parent=11 // pred_check_branch
        %164 = sbr.rel (%p162) target = $region16
      $region15: #{channel_attention.1} parent=11 // pred_region
        _
      $region16: #{channel_attention.1} parent=11 // pred_fallthru
        _
      // Predicated region
      $region17: #{channel_attention.1} parent=11 // pred_check
        %p165 = pneg %p79
      $region18: #{channel_attention.1} parent=11 // pred_check_branch
        %167 = sbr.rel (%p165) target = $region20
      $region19: #{channel_attention.1} parent=11 // pred_region
        _
      $region20: #{channel_attention.1} parent=11 // pred_fallthru
        _
      // Predicated region
      $region21: #{channel_attention.1} parent=11 // pred_check
        %p168 = pneg %p100
      $region22: #{channel_attention.1} parent=11 // pred_check_branch
        %170 = sbr.rel (%p168) target = $region24
      $region23: #{channel_attention.1} parent=11 // pred_region
        _
      $region24: #{channel_attention.1} parent=11 // pred_fallthru
        _
      // Predicated region
      $region25: #{channel_attention.1} parent=11 // pred_check
        %p171 = pneg %p121
      $region26: #{channel_attention.1} parent=11 // pred_check_branch
        %173 = sbr.rel (%p171) target = $region28
      $region27: #{channel_attention.1} parent=11 // pred_region
        _
      $region28: #{channel_attention.1} parent=11 // pred_fallthru
        _
    $region12: #{channel_attention.1} parent=5 // pred_fallthru
      _
    %p174 = scmp.lt.s32.totalorder %s11, 2
    // Predicated region
    $region29: #{channel_attention.1} parent=5 // pred_check
      %p175 = pneg %p174
    $region30: #{channel_attention.1} parent=5 // pred_check_branch
      %177 = sbr.rel (%p175) target = $region32
    $region31: #{channel_attention.1} parent=5 // pred_region
      // Predicated region
      $region33: #{channel_attention.1} parent=31 // pred_check
        %p178 = pneg %p31
      $region34: #{channel_attention.1} parent=31 // pred_check_branch
        %180 = sbr.rel (%p178) target = $region36
      $region35: #{channel_attention.1} parent=31 // pred_region
        %p181 = scmp.lt.s32.totalorder %s11, 1
        %s182 = scalar_select %p181, %s11, 1
        %s183 = smul.addr %s182, 4
        %s184 = smul.addr %s183, 8
        %s185 = scalar_lea.vmem %s0, %s184
      $region36: #{channel_attention.1} parent=31 // pred_fallthru
        _
    $region32: #{channel_attention.1} parent=5 // pred_fallthru
      _
    %p186 = scmp.le.s32.totalorder 1, %s11
    %p187 = scmp.lt.s32.totalorder %s11, 3
    %p188 = pnand %p186, %p187
    %p189 = pneg %p188
    // Predicated region
    $region37: #{channel_attention.1} parent=5 // pred_check
      _
    $region38: #{channel_attention.1} parent=5 // pred_check_branch
      %191 = sbr.rel (%p188) target = $region40
    $region39: #{channel_attention.1} parent=5 // pred_region
      %s192 = ssub.s32 %s11, 1
      %p193 = scmp.lt.s32.totalorder %s16, 1
      %s194 = scalar_select %p193, %s16, 1
      %s195 = smul.addr %s194, 4
      %s196 = smul.addr %s195, 8
      %s197 = scalar_lea.vmem %s0, %s196
      %p198 = pneg %p37
      %p199 = pneg %p34
      %p200 = pneg %p58
      %p201 = pneg %p55
      %p202 = pneg %p79
      %p203 = pneg %p76
      %p204 = pneg %p100
      %p205 = pneg %p97
      %p206 = pneg %p121
      %p207 = pneg %p118
      %p208 = pneg %p147
      %p209 = pneg %p144
      %p210 = scmp.lt.s32.totalorder %s16, 1
      %s211 = scalar_select %p210, %s16, 1
      %s212 = smul.addr %s211, 4
      %s213 = smul.addr %s212, 8
      %s214 = scalar_lea.vmem %s5, %s213
      %p215 = scmp.lt.s32.totalorder %s16, 1
      %s216 = scalar_select %p215, %s16, 1
      %s217 = smul.addr %s216, 4
      %s218 = smul.addr %s217, 8
      %s219 = scalar_lea.vmem %s0, %s218
      %p220 = scmp.lt.s32.totalorder %s16, 1
      %s221 = scalar_select %p220, %s16, 1
      %s222 = smul.addr %s221, 4
      %s223 = smul.addr %s222, 8
      %s224 = scalar_lea.vmem %s5, %s223
      %v225 = vld [vmem:[%s219] sm:$0xff]
      %v226 = vld [vmem:[%s219 + $0x8] sm:$0xff]
      %v227 = vld [vmem:[%s219 + $0x10] sm:$0xff]
      %v228 = vld [vmem:[%s219 + $0x18] sm:$0xff]
      %v229 = vadd.f32 %v225, %v226
      %230 = vadd.xlane.f32.xlu0 %v229
      %v231 = vpop.xlane.xlu0 %230
      %v232 = vadd.f32 %v227, %v228
      %233 = vadd.xlane.f32.xlu0 %v232
      %v234 = vpop.xlane.xlu0 %233
      %v235 = vmul.f32 %v231, 0.00390625
      %v236 = vmul.f32 %v234, 0.00390625
      %v237 = vmax.f32 %v225, %v226
      %238 = vmax.xlane.f32.xlu0 %v237
      %v239 = vpop.xlane.xlu0 %238
      %v240 = vmax.f32 %v227, %v228
      %241 = vmax.xlane.f32.xlu0 %v240
      %v242 = vpop.xlane.xlu0 %241
      %v243 = vld [vmem:[%s1] sm:$0xff]
      %v244 = vld [vmem:[%s1 + $0x8] sm:$0xff]
      %v245 = vld [vmem:[%s2] sm:$0x1]
      %v246 = vld [vmem:[%s3] sm:$0xff]
      %v247 = vld [vmem:[%s3 + $0x8] sm:$0xff]
      %v248 = vld [vmem:[%s4] sm:$0xff]
      %v249 = vld [vmem:[%s4 + $0x8] sm:$0xff]
      %v250 = vmul.f32 %v243, %v235
      %v251 = vmul.f32 %v244, %v236
      %vm252 = vcmask 15360
      %v253 = vsel %vm252, %v250, 0.0
      %v254 = vsel %vm252, %v251, 0.0
      %v255 = vadd.f32 %v253, %v254
      %v256 = vrot.slane %v255, 4
      %v257 = vadd.f32 %v255, %v256
      %v258 = vrot.slane %v257, 2
      %v259 = vadd.f32 %v257, %v258
      %v260 = vrot.slane %v259, 1
      %v261 = vadd.f32 %v259, %v260
      %v262 = vadd.f32 %v261, %v245
      %v263 = vmax.f32 %v262, 0.0
      %v264 = vmul.f32 %v243, %v239
      %v265 = vmul.f32 %v244, %v242
      %v266 = vsel %vm252, %v264, 0.0
      %v267 = vsel %vm252, %v265, 0.0
      %v268 = vadd.f32 %v266, %v267
      %v269 = vrot.slane %v268, 4
      %v270 = vadd.f32 %v268, %v269
      %v271 = vrot.slane %v270, 2
      %v272 = vadd.f32 %v270, %v271
      %v273 = vrot.slane %v272, 1
      %v274 = vadd.f32 %v272, %v273
      %v275 = vadd.f32 %v274, %v245
      %v276 = vmax.f32 %v275, 0.0
      %v277 = vlaneseq
      %v278 = vshrl.u32 %v277, 7
      %v279 = vsub.s32 0, %v278
      %v280 = vrot.slane %v263, %v279
      %v281 = vmul.f32 %v246, %v280
      %v282 = vmul.f32 %v247, %v280
      %v283 = vsel %vm252, %v281, 0.0
      %284 = vadd.xlane.f32.xlu0 %v283
      %v285 = vpop.xlane.xlu0 %284
      %v286 = vsel %vm252, %v282, 0.0
      %287 = vadd.xlane.f32.xlu0 %v286
      %v288 = vpop.xlane.xlu0 %287
      %v289 = vadd.f32 %v285, %v248
      %v290 = vadd.f32 %v288, %v249
      %v291 = vlaneseq
      %v292 = vshrl.u32 %v291, 7
      %v293 = vsub.s32 0, %v292
      %v294 = vrot.slane %v276, %v293
      %v295 = vmul.f32 %v246, %v294
      %v296 = vmul.f32 %v247, %v294
      %v297 = vsel %vm252, %v295, 0.0
      %298 = vadd.xlane.f32.xlu0 %v297
      %v299 = vpop.xlane.xlu0 %298
      %v300 = vsel %vm252, %v296, 0.0
      %301 = vadd.xlane.f32.xlu0 %v300
      %v302 = vpop.xlane.xlu0 %301
      %v303 = vadd.f32 %v299, %v248
      %v304 = vadd.f32 %v302, %v249
      %v305 = vadd.f32 %v289, %v303
      %v306 = vadd.f32 %v290, %v304
      %v307 = vxor.u32 %v305, 2147483648
      %v308 = vxor.u32 %v306, 2147483648
      %v309 = vmul.f32 %v307, 1.442695
      %v310 = vpow.pop %v309
      %v311 = vmul.f32 %v308, 1.442695
      %v312 = vpow.pop %v311
      %v313 = vadd.f32 %v310, 1.0
      %v314 = vadd.f32 %v312, 1.0
      %v315 = vrcp.pop %v313
      %v316 = vmul.f32 1.0, %v315
      %v317 = vrcp.pop %v314
      %v318 = vmul.f32 1.0, %v317
      %320 = vset.pattern.permute.xlu0 0
      %321 = vperm.xlu0 %320, %v316
      %v322 = vpop.permute.xlu0 %321
      %325 = vset.pattern.permute.xlu0 0
      %326 = vperm.xlu0 %325, %v318
      %v327 = vpop.permute.xlu0 %326
      %v329 = vmul.f32 %v322, %v225
      %v330 = vmul.f32 %v322, %v226
      %v331 = vmul.f32 %v327, %v227
      %v332 = vmul.f32 %v327, %v228
      %333 = vst [vmem:[%s224] sm:$0xff] %v329
      %334 = vst [vmem:[%s224 + $0x8] sm:$0xff] %v330
      %335 = vst [vmem:[%s224 + $0x10] sm:$0xff] %v331
      %336 = vst [vmem:[%s224 + $0x18] sm:$0xff] %v332
      %p337 = scmp.lt.s32.totalorder %s16, 1
      %s338 = scalar_select %p337, %s16, 1
      %s339 = smul.addr %s338, 4
      %s340 = smul.addr %s339, 8
      %s341 = scalar_lea.vmem %s5, %s340
      // Predicated region
      $region41: #{channel_attention.1} parent=39 // pred_check
        %p342 = pneg %p144
      $region42: #{channel_attention.1} parent=39 // pred_check_branch
        %344 = sbr.rel (%p342) target = $region44
      $region43: #{channel_attention.1} parent=39 // pred_region
        _
      $region44: #{channel_attention.1} parent=39 // pred_fallthru
        _
    $region40: #{channel_attention.1} parent=5 // pred_fallthru
      _
    %p345 = scmp.le.s32.totalorder 2, %s11
    // Predicated region
    $region45: #{channel_attention.1} parent=5 // pred_check
      %p346 = pneg %p345
    $region46: #{channel_attention.1} parent=5 // pred_check_branch
      %348 = sbr.rel (%p346) target = $region48
    $region47: #{channel_attention.1} parent=5 // pred_region
      %s349 = ssub.s32 %s11, 2
      // Predicated region
      $region49: #{channel_attention.1} parent=47 // pred_check
        %p350 = pneg %p150
      $region50: #{channel_attention.1} parent=47 // pred_check_branch
        %352 = sbr.rel (%p350) target = $region52
      $region51: #{channel_attention.1} parent=47 // pred_region
        %p353 = scmp.lt.s32.totalorder %s17, 1
        %s354 = scalar_select %p353, %s17, 1
        %s355 = smul.addr %s354, 4
        %s356 = smul.addr %s355, 8
        %s357 = scalar_lea.vmem %s5, %s356
      $region52: #{channel_attention.1} parent=47 // pred_fallthru
        _
    $region48: #{channel_attention.1} parent=5 // pred_fallthru
      _
  $region6: #{channel_attention.1} parent=0 // loop_footer
    %s15 = sadd.s32 1, %s11
  $region7: #{channel_attention.1} parent=0 // loop_footer_branch
    %10 = sbr.rel target = $region3
  $region8: #{channel_attention.1} parent=0 // loop_exit
    _

</llo_original>
